<compile_context>
chip_gen: v7x
topology: tpu7x:2x2x1
jax: 0.10.0
libtpu: 0.0.40
codegen_flags: <defaults>
</compile_context>

<pallas_src>
import functools

import jax
import jax.numpy as jnp
from jax.experimental import pallas as pl
from jax.experimental.pallas import tpu as pltpu


def _round_up(n, m):
    return ((n + m - 1) // m) * m


def _default_compute_dtype():
    """bf16 MXU operands on v6e/v7x, f32 on v5e and anything unknown."""
    try:
        kind = jax.devices()[0].device_kind.lower()
    except Exception:
        return jnp.float32
    if ("v6" in kind) or ("v7" in kind):
        return jnp.bfloat16
    return jnp.float32


def _mlp_kernel(x_ref, w1_ref, b1_ref, w2_ref, b2_ref,
                w3_ref, b3_ref, w4_ref, b4_ref, o_ref):
    # MXU operand dtype (f32 or bf16) comes from the weights; accumulation is
    # always f32, and the elementwise epilogue (bias add / ReLU / tanh) stays
    # in f32 so it is cheap on every TPU generation (v5e has no bf16 VPU/EUP).
    # When cdt == f32 the inter-layer astypes are trace-time no-ops.
    cdt = w1_ref.dtype

    x = x_ref[...]  # already in cdt: cast at the (jit-fused) wrapper boundary
    # layer 1: Linear + ReLU
    h = jnp.dot(x, w1_ref[...], preferred_element_type=jnp.float32) + b1_ref[...]
    h = jnp.maximum(h, 0.0)
    # layer 2: Linear + ReLU
    h = jnp.dot(h.astype(cdt), w2_ref[...],
                preferred_element_type=jnp.float32) + b2_ref[...]
    h = jnp.maximum(h, 0.0)
    # layer 3: Linear + tanh
    h = jnp.dot(h.astype(cdt), w3_ref[...],
                preferred_element_type=jnp.float32) + b3_ref[...]
    h = jnp.tanh(h)
    # output layer: Linear (no activation)
    y = jnp.dot(h.astype(cdt), w4_ref[...],
                preferred_element_type=jnp.float32) + b4_ref[...]
    # TODO(synk): lane-sparse (8-wide) store; see module docstring about a
    # lane-dense repack if the store slot ever becomes the binding slot.
    o_ref[...] = y.astype(o_ref.dtype)


@functools.partial(jax.jit, static_argnames=("block_rows", "compute_dtype"))
def network_forward(x, params, block_rows=4096, compute_dtype=None):
    """Forward pass of the 4-layer MLP.

    params = (w1, b1, w2, b2, w3, b3, w4, b4); weights are (in, out),
    biases are (1, out).  `compute_dtype` sets the MXU operand dtype
    (None -> auto: bf16 on v6e/v7x, f32 on v5e); accumulation is always f32.
    """
    w1, b1, w2, b2, w3, b3, w4, b4 = params
    B = x.shape[0]
    S, H = w1.shape
    A = w4.shape[1]

    # ---- row-tile sizing -------------------------------------------------
    # Multiple of 8 (sublane granularity), capped at block_rows.  Large tiles
    # amortize the ~0.35us per-grid-step overhead; but keep >= 4 steps when
    # the batch is big enough (>= 512 rows/step) so v7x megacore can shard
    # the "parallel" batch axis across both TensorCores.
    b8 = _round_up(max(B, 1), 8)
    tb = _round_up(min(block_rows, b8), 8)
    if (b8 // tb) < 4 and b8 >= 4 * 512:
        tb = _round_up(pl.cdiv(b8, 4), 8)
    b_pad = _round_up(B, tb)
    if b_pad != B:
        x = jnp.pad(x, ((0, b_pad - B), (0, 0)))

    # ---- dtype handling ----------------------------------------------------
    cdt = jnp.dtype(_default_compute_dtype() if compute_dtype is None
                    else compute_dtype)
    # Cast matmul operands (activations + weights) to the MXU dtype at the
    # boundary (halves HBM/VMEM traffic for bf16); keep biases in f32.
    x_c = x.astype(cdt)
    w1c, w2c, w3c, w4c = (w.astype(cdt) for w in (w1, w2, w3, w4))
    b1f, b2f, b3f, b4f = (b.astype(jnp.float32) for b in (b1, b2, b3, b4))

    grid = (pl.cdiv(b_pad, tb),)

    const = lambda i: (0, 0)  # weights/biases: same block every step -> VMEM-resident
    in_specs = [
        pl.BlockSpec((tb, S), lambda i: (i, 0)),        # x: tiled over batch
        pl.BlockSpec((S, H), const), pl.BlockSpec((1, H), const),
        pl.BlockSpec((H, H), const), pl.BlockSpec((1, H), const),
        pl.BlockSpec((H, H), const), pl.BlockSpec((1, H), const),
        pl.BlockSpec((H, A), const), pl.BlockSpec((1, A), const),
    ]
    out_specs = pl.BlockSpec((tb, A), lambda i: (i, 0))

    # ---- scheduler hints -------------------------------------------------
    flops = 2 * b_pad * (S * H + H * H + H * H + H * A)
    bytes_accessed = (
        x_c.size * x_c.dtype.itemsize
        + sum(a.size * a.dtype.itemsize
              for a in (w1c, w2c, w3c, w4c, b1f, b2f, b3f, b4f))
        + b_pad * A * 4
    )
    cost = pl.CostEstimate(flops=flops, transcendentals=b_pad * H,
                           bytes_accessed=bytes_accessed)

    # Raise the scoped-VMEM limit only if the estimated per-step footprint is
    # large (v5e's default is 16 MiB); no-op for the default tile sizes.
    itemsize = cdt.itemsize
    vmem_est = (
        2 * tb * S * itemsize                       # double-buffered x tiles
        + 2 * tb * A * 4                            # double-buffered out tiles
        + 2 * (S * H + 2 * H * H + H * A) * itemsize  # weight buffers
        + 2 * (3 * H + A) * 4                       # bias buffers
        + 4 * tb * H * 4                            # f32 intermediates headroom
    )
    compiler_kwargs = {}
    if vmem_est > 8 * 1024 * 1024:
        compiler_kwargs["vmem_limit_bytes"] = int(
            min(2 * vmem_est, 100 * 1024 * 1024))

    out = pl.pallas_call(
        _mlp_kernel,
        out_shape=jax.ShapeDtypeStruct((b_pad, A), jnp.float32),
        grid=grid,
        in_specs=in_specs,
        out_specs=out_specs,
        compiler_params=pltpu.CompilerParams(
            dimension_semantics=("parallel",),
            **compiler_kwargs,
        ),
        cost_estimate=cost,
    )(x_c, w1c, b1f, w2c, b2f, w3c, b3f, w4c, b4f)

    return out[:B] if b_pad != B else out


def init_linear(key, in_f, out_f):
    # PyTorch nn.Linear default init: U(-1/sqrt(in_f), 1/sqrt(in_f))
    kw, kb = jax.random.split(key)
    bound = 1.0 / jnp.sqrt(jnp.float32(in_f))
    w = jax.random.uniform(kw, (in_f, out_f), jnp.float32, -bound, bound)
    b = jax.random.uniform(kb, (1, out_f), jnp.float32, -bound, bound)
    return w, b


def reference_forward(x, params):
    (w1, b1, w2, b2, w3, b3, w4, b4) = params
    h = jnp.maximum(x @ w1 + b1, 0.0)
    h = jnp.maximum(h @ w2 + b2, 0.0)
    h = jnp.tanh(h @ w3 + b3)
    return h @ w4 + b4


if __name__ == "__main__":
    # DQN-style MLP at small shapes.
    batch = 8
    state_num = 16
    hidden_layer = 32
    action_num = 8

    key = jax.random.PRNGKey(0)
    k_x, k1, k2, k3, k4 = jax.random.split(key, 5)

    x = jax.random.normal(k_x, (batch, state_num), jnp.float32)
    w1, b1 = init_linear(k1, state_num, hidden_layer)
    w2, b2 = init_linear(k2, hidden_layer, hidden_layer)
    w3, b3 = init_linear(k3, hidden_layer, hidden_layer)
    w4, b4 = init_linear(k4, hidden_layer, action_num)
    params = (w1, b1, w2, b2, w3, b3, w4, b4)

    ref = reference_forward(x, params)

    # f32 path: matches the pure-JAX / PyTorch reference tightly.
    out = network_forward(x, params, compute_dtype=jnp.float32)
    jax.block_until_ready(out)
    assert out.shape == (batch, action_num)
    assert jnp.allclose(out, ref, atol=1e-5, rtol=1e-5)

    # bf16 matmul-operand path (v6e/v7x fast path), f32 accumulation.
    out_bf16 = network_forward(x, params, compute_dtype=jnp.bfloat16)
    jax.block_until_ready(out_bf16)
    assert out_bf16.shape == (batch, action_num)
    assert jnp.allclose(out_bf16, ref, atol=5e-2, rtol=5e-2)

    # Auto dtype (bf16 on v6e/v7x, f32 on v5e) with the default big row tile.
    out_auto = network_forward(x, params)
    jax.block_until_ready(out_auto)
    assert out_auto.shape == (batch, action_num)
    assert jnp.allclose(out_auto, ref, atol=5e-2, rtol=5e-2)

    # Odd batch with a small row tile: exercises the pad/slice path and a
    # multi-step batch grid with VMEM-resident weights.
    x_odd = jax.random.normal(k_x, (13, state_num), jnp.float32)
    out_odd = network_forward(x_odd, params, block_rows=8,
                              compute_dtype=jnp.float32)
    jax.block_until_ready(out_odd)
    ref_odd = reference_forward(x_odd, params)
    assert out_odd.shape == (13, action_num)
    assert jnp.allclose(out_odd, ref_odd, atol=1e-5, rtol=1e-5)

    # Large batch: triggers the ">= 4 grid steps" megacore split path.
    x_big = jax.random.normal(k_x, (6000, state_num), jnp.float32)
    out_big = network_forward(x_big, params, compute_dtype=jnp.float32)
    jax.block_until_ready(out_big)
    ref_big = reference_forward(x_big, params)
    assert out_big.shape == (6000, action_num)
    assert jnp.allclose(out_big, ref_big, atol=1e-4, rtol=1e-4)

    print("KERNEL_OK")
</pallas_src>

<mosaic_0001>
module attributes {stable_mosaic.version = 11 : i64} {
  func.func @_mlp_kernel(%arg0: i32, %arg1: memref<8x16xf32, #tpu.memory_space<vmem>>, %arg2: memref<16x32xf32, #tpu.memory_space<vmem>>, %arg3: memref<1x32xf32, #tpu.memory_space<vmem>>, %arg4: memref<32x32xf32, #tpu.memory_space<vmem>>, %arg5: memref<1x32xf32, #tpu.memory_space<vmem>>, %arg6: memref<32x32xf32, #tpu.memory_space<vmem>>, %arg7: memref<1x32xf32, #tpu.memory_space<vmem>>, %arg8: memref<32x8xf32, #tpu.memory_space<vmem>>, %arg9: memref<1x8xf32, #tpu.memory_space<vmem>>, %arg10: memref<8x8xf32, #tpu.memory_space<vmem>>) attributes {dimension_semantics = [#tpu.dimension_semantics<parallel>], iteration_bounds = array<i64: 1>, scalar_prefetch = 0 : i64, scratch_operands = 0 : i64, tpu.core_type = #tpu.core_type<tc>, window_params = [{transform_indices = @transform_0, window_bounds = array<i64: 8, 16>}, {pipeline_mode = #tpu.pipeline_mode<synchronous>, transform_indices = @transform_1, window_bounds = array<i64: 16, 32>}, {pipeline_mode = #tpu.pipeline_mode<synchronous>, transform_indices = @transform_2, window_bounds = array<i64: 1, 32>}, {pipeline_mode = #tpu.pipeline_mode<synchronous>, transform_indices = @transform_3, window_bounds = array<i64: 32, 32>}, {pipeline_mode = #tpu.pipeline_mode<synchronous>, transform_indices = @transform_4, window_bounds = array<i64: 1, 32>}, {pipeline_mode = #tpu.pipeline_mode<synchronous>, transform_indices = @transform_5, window_bounds = array<i64: 32, 32>}, {pipeline_mode = #tpu.pipeline_mode<synchronous>, transform_indices = @transform_6, window_bounds = array<i64: 1, 32>}, {pipeline_mode = #tpu.pipeline_mode<synchronous>, transform_indices = @transform_7, window_bounds = array<i64: 32, 8>}, {pipeline_mode = #tpu.pipeline_mode<synchronous>, transform_indices = @transform_8, window_bounds = array<i64: 1, 8>}, {transform_indices = @transform_9, window_bounds = array<i64: 8, 8>}]} {
    %c0 = arith.constant 0 : index
    %c0_0 = arith.constant 0 : index
    %0 = vector.load %arg1[%c0, %c0_0] : memref<8x16xf32, #tpu.memory_space<vmem>>, vector<8x16xf32>
    %c0_1 = arith.constant 0 : index
    %c0_2 = arith.constant 0 : index
    %1 = vector.load %arg2[%c0_1, %c0_2] : memref<16x32xf32, #tpu.memory_space<vmem>>, vector<16x32xf32>
    %cst = arith.constant dense<0.000000e+00> : vector<8x32xf32>
    %2 = tpu.matmul %0, %1, %cst {dimension_numbers = #tpu.dot_dimension_numbers<[1], [0], [0], [1], [0, 0, 1, 1], [], []>} : vector<8x16xf32>, vector<16x32xf32>, vector<8x32xf32> -> vector<8x32xf32>
    %c0_3 = arith.constant 0 : index
    %c0_4 = arith.constant 0 : index
    %3 = vector.load %arg3[%c0_3, %c0_4] : memref<1x32xf32, #tpu.memory_space<vmem>>, vector<1x32xf32>
    %4 = vector.broadcast %3 : vector<1x32xf32> to vector<8x32xf32>
    %5 = arith.addf %2, %4 : vector<8x32xf32>
    %cst_5 = arith.constant 0.000000e+00 : f32
    %6 = vector.broadcast %cst_5 : f32 to vector<8x32xf32>
    %7 = arith.maximumf %5, %6 : vector<8x32xf32>
    %c0_6 = arith.constant 0 : index
    %c0_7 = arith.constant 0 : index
    %8 = vector.load %arg4[%c0_6, %c0_7] : memref<32x32xf32, #tpu.memory_space<vmem>>, vector<32x32xf32>
    %cst_8 = arith.constant dense<0.000000e+00> : vector<8x32xf32>
    %9 = tpu.matmul %7, %8, %cst_8 {dimension_numbers = #tpu.dot_dimension_numbers<[1], [0], [0], [1], [0, 0, 1, 1], [], []>} : vector<8x32xf32>, vector<32x32xf32>, vector<8x32xf32> -> vector<8x32xf32>
    %c0_9 = arith.constant 0 : index
    %c0_10 = arith.constant 0 : index
    %10 = vector.load %arg5[%c0_9, %c0_10] : memref<1x32xf32, #tpu.memory_space<vmem>>, vector<1x32xf32>
    %11 = vector.broadcast %10 : vector<1x32xf32> to vector<8x32xf32>
    %12 = arith.addf %9, %11 : vector<8x32xf32>
    %cst_11 = arith.constant 0.000000e+00 : f32
    %13 = vector.broadcast %cst_11 : f32 to vector<8x32xf32>
    %14 = arith.maximumf %12, %13 : vector<8x32xf32>
    %c0_12 = arith.constant 0 : index
    %c0_13 = arith.constant 0 : index
    %15 = vector.load %arg6[%c0_12, %c0_13] : memref<32x32xf32, #tpu.memory_space<vmem>>, vector<32x32xf32>
    %cst_14 = arith.constant dense<0.000000e+00> : vector<8x32xf32>
    %16 = tpu.matmul %14, %15, %cst_14 {dimension_numbers = #tpu.dot_dimension_numbers<[1], [0], [0], [1], [0, 0, 1, 1], [], []>} : vector<8x32xf32>, vector<32x32xf32>, vector<8x32xf32> -> vector<8x32xf32>
    %c0_15 = arith.constant 0 : index
    %c0_16 = arith.constant 0 : index
    %17 = vector.load %arg7[%c0_15, %c0_16] : memref<1x32xf32, #tpu.memory_space<vmem>>, vector<1x32xf32>
    %18 = vector.broadcast %17 : vector<1x32xf32> to vector<8x32xf32>
    %19 = arith.addf %16, %18 : vector<8x32xf32>
    %20 = math.tanh %19 : vector<8x32xf32>
    %c0_17 = arith.constant 0 : index
    %c0_18 = arith.constant 0 : index
    %21 = vector.load %arg8[%c0_17, %c0_18] : memref<32x8xf32, #tpu.memory_space<vmem>>, vector<32x8xf32>
    %cst_19 = arith.constant dense<0.000000e+00> : vector<8x8xf32>
    %22 = tpu.matmul %20, %21, %cst_19 {dimension_numbers = #tpu.dot_dimension_numbers<[1], [0], [0], [1], [0, 0, 1, 1], [], []>} : vector<8x32xf32>, vector<32x8xf32>, vector<8x8xf32> -> vector<8x8xf32>
    %c0_20 = arith.constant 0 : index
    %c0_21 = arith.constant 0 : index
    %23 = vector.load %arg9[%c0_20, %c0_21] : memref<1x8xf32, #tpu.memory_space<vmem>>, vector<1x8xf32>
    %24 = vector.broadcast %23 : vector<1x8xf32> to vector<8x8xf32>
    %25 = arith.addf %22, %24 : vector<8x8xf32>
    %c0_22 = arith.constant 0 : index
    %c0_23 = arith.constant 0 : index
    %26 = vector.load %arg10[%c0_22, %c0_23] : memref<8x8xf32, #tpu.memory_space<vmem>>, vector<8x8xf32>
    tpu.vector_store %arg10[%c0_22, %c0_23], %25 {strides = array<i32>} : memref<8x8xf32, #tpu.memory_space<vmem>>, vector<8x8xf32>,
    return
  }
  func.func @transform_0(%arg0: i32) -> (i32, i32) {
    %c0_i32 = arith.constant 0 : i32
    %c0_i32_0 = arith.constant 0 : i32
    return %arg0, %c0_i32 : i32, i32
  }
  func.func @transform_1(%arg0: i32) -> (i32, i32) {
    %c0_i32 = arith.constant 0 : i32
    %c0_i32_0 = arith.constant 0 : i32
    %c0_i32_1 = arith.constant 0 : i32
    return %c0_i32, %c0_i32_0 : i32, i32
  }
  func.func @transform_2(%arg0: i32) -> (i32, i32) {
    %c0_i32 = arith.constant 0 : i32
    %c0_i32_0 = arith.constant 0 : i32
    %c0_i32_1 = arith.constant 0 : i32
    return %c0_i32, %c0_i32_0 : i32, i32
  }
  func.func @transform_3(%arg0: i32) -> (i32, i32) {
    %c0_i32 = arith.constant 0 : i32
    %c0_i32_0 = arith.constant 0 : i32
    %c0_i32_1 = arith.constant 0 : i32
    return %c0_i32, %c0_i32_0 : i32, i32
  }
  func.func @transform_4(%arg0: i32) -> (i32, i32) {
    %c0_i32 = arith.constant 0 : i32
    %c0_i32_0 = arith.constant 0 : i32
    %c0_i32_1 = arith.constant 0 : i32
    return %c0_i32, %c0_i32_0 : i32, i32
  }
  func.func @transform_5(%arg0: i32) -> (i32, i32) {
    %c0_i32 = arith.constant 0 : i32
    %c0_i32_0 = arith.constant 0 : i32
    %c0_i32_1 = arith.constant 0 : i32
    return %c0_i32, %c0_i32_0 : i32, i32
  }
  func.func @transform_6(%arg0: i32) -> (i32, i32) {
    %c0_i32 = arith.constant 0 : i32
    %c0_i32_0 = arith.constant 0 : i32
    %c0_i32_1 = arith.constant 0 : i32
    return %c0_i32, %c0_i32_0 : i32, i32
  }
  func.func @transform_7(%arg0: i32) -> (i32, i32) {
    %c0_i32 = arith.constant 0 : i32
    %c0_i32_0 = arith.constant 0 : i32
    %c0_i32_1 = arith.constant 0 : i32
    return %c0_i32, %c0_i32_0 : i32, i32
  }
  func.func @transform_8(%arg0: i32) -> (i32, i32) {
    %c0_i32 = arith.constant 0 : i32
    %c0_i32_0 = arith.constant 0 : i32
    %c0_i32_1 = arith.constant 0 : i32
    return %c0_i32, %c0_i32_0 : i32, i32
  }
  func.func @transform_9(%arg0: i32) -> (i32, i32) {
    %c0_i32 = arith.constant 0 : i32
    %c0_i32_0 = arith.constant 0 : i32
    return %arg0, %c0_i32 : i32, i32
  }
}

</mosaic_0001>

<llo_original>
// kernel: network_forward.1
$region0: #{network_forward.1}
  #allocation0 [shape = 'u32[]', space=smem, size = 0x4, offset = 0x4, fixed_abs, tag = 'smem constant byte address 0x4 - core index']
  #allocation1 [shape = 'u32[144,128]{1,0:T(1,128)}', space=vmem, size = 0x12000, scoped, tag = 'internal scratch']
  %s0 = inlined_call_operand.hbm [shape: f32[8,16], index: 0, kind: input, shape index: {}]
  %s1 = inlined_call_operand.vmem [shape: f32[16,32], index: 1, kind: input, shape index: {}]
  %s2 = inlined_call_operand.vmem [shape: f32[1,32], index: 2, kind: input, shape index: {}]
  %s3 = inlined_call_operand.vmem [shape: f32[32,32], index: 3, kind: input, shape index: {}]
  %s4 = inlined_call_operand.vmem [shape: f32[1,32], index: 4, kind: input, shape index: {}]
  %s5 = inlined_call_operand.hbm [shape: f32[32,32], index: 5, kind: input, shape index: {}]
  %s6 = inlined_call_operand.vmem [shape: f32[1,32], index: 6, kind: input, shape index: {}]
  %s7 = inlined_call_operand.vmem [shape: f32[32,8], index: 7, kind: input, shape index: {}]
  %s8 = inlined_call_operand.vmem [shape: f32[1,8], index: 8, kind: input, shape index: {}]
  %s9 = inlined_call_operand.hbm [shape: f32[8,8], index: 9, kind: output, shape index: {}]
  %s10 = sld [smem:[#allocation0]]
  $region54: #{network_forward.1} parent=0
    _
  %s12 = ssub.s32 1, %s10
  %s13 = scalar_select 0, %s12, %s10
  $region1: #{network_forward.1} parent=0
    #allocation2 [shape = 'u8[4096]{0}', space=vmem, size = 0x1000, scoped, tag = 'input window, operand 0, single buffered']
    #allocation3 [shape = 's32[1]{0}', space=sflag, size = 0x4, scoped, tag = 'scoped memory for network_forward.1']
    #allocation4 [shape = 's32[1]{0}', space=sflag, size = 0x4, scoped, tag = 'scoped memory for network_forward.1']
    #allocation5 [shape = 'u8[16384]{0}', space=vmem, size = 0x4000, scoped, tag = 'input window, operand 5, single buffered']
    #allocation6 [shape = 's32[1]{0}', space=sflag, size = 0x4, scoped, tag = 'scoped memory for network_forward.1']
    #allocation7 [shape = 'u8[4096]{0}', space=vmem, size = 0x1000, scoped, tag = 'output window, operand 0, single buffered']
    %14 = vsyncpa [#allocation3], 0
    %15 = vsyncpa [#allocation6], 0
    %16 = vsyncpa [#allocation4], 0
    // Predicated region
    $region2: #{network_forward.1} parent=1 // pred_check
      _
    $region3: #{network_forward.1} parent=1 // pred_check_branch
      %18 = sbr.rel (0) target = $region5
    $region4: #{network_forward.1} parent=1 // pred_region
      %s20 = ssub.s32 128, 128
      %21 = vsyncadd [#allocation3], %s20
      %s23 = sshll.u32 [#allocation2], 4
      %s24 = int_to_ptr.vmem [resolvable:$true] %s23
      %26 = dma.hbm_to_vmem [thread:$0]  %s0, 128, %s24, [#allocation3]
    $region5: #{network_forward.1} parent=1 // pred_fallthru
      _
    // Predicated region
    $region6: #{network_forward.1} parent=1 // pred_check
      _
    $region7: #{network_forward.1} parent=1 // pred_check_branch
      %28 = sbr.rel (0) target = $region9
    $region8: #{network_forward.1} parent=1 // pred_region
      _
    $region9: #{network_forward.1} parent=1 // pred_fallthru
      _
    // Predicated region
    $region10: #{network_forward.1} parent=1 // pred_check
      _
    $region11: #{network_forward.1} parent=1 // pred_check_branch
      %30 = sbr.rel (0) target = $region13
    $region12: #{network_forward.1} parent=1 // pred_region
      _
    $region13: #{network_forward.1} parent=1 // pred_fallthru
      _
    // Predicated region
    $region14: #{network_forward.1} parent=1 // pred_check
      _
    $region15: #{network_forward.1} parent=1 // pred_check_branch
      %32 = sbr.rel (0) target = $region17
    $region16: #{network_forward.1} parent=1 // pred_region
      _
    $region17: #{network_forward.1} parent=1 // pred_fallthru
      _
    // Predicated region
    $region18: #{network_forward.1} parent=1 // pred_check
      _
    $region19: #{network_forward.1} parent=1 // pred_check_branch
      %34 = sbr.rel (0) target = $region21
    $region20: #{network_forward.1} parent=1 // pred_region
      _
    $region21: #{network_forward.1} parent=1 // pred_fallthru
      _
    // Predicated region
    $region22: #{network_forward.1} parent=1 // pred_check
      _
    $region23: #{network_forward.1} parent=1 // pred_check_branch
      %36 = sbr.rel (0) target = $region25
    $region24: #{network_forward.1} parent=1 // pred_region
      %s38 = ssub.s32 512, 512
      %39 = vsyncadd [#allocation6], %s38
      %s40 = sshll.u32 [#allocation5], 4
      %s41 = int_to_ptr.vmem [resolvable:$true] %s40
      %46 = dma.hbm_to_vmem [thread:$0]  %s5, 512, %s41, [#allocation6], 128, 128, 8
    $region25: #{network_forward.1} parent=1 // pred_fallthru
      _
    // Predicated region
    $region26: #{network_forward.1} parent=1 // pred_check
      _
    $region27: #{network_forward.1} parent=1 // pred_check_branch
      %48 = sbr.rel (0) target = $region29
    $region28: #{network_forward.1} parent=1 // pred_region
      _
    $region29: #{network_forward.1} parent=1 // pred_fallthru
      _
    // Predicated region
    $region30: #{network_forward.1} parent=1 // pred_check
      _
    $region31: #{network_forward.1} parent=1 // pred_check_branch
      %50 = sbr.rel (0) target = $region33
    $region32: #{network_forward.1} parent=1 // pred_region
      _
    $region33: #{network_forward.1} parent=1 // pred_fallthru
      _
    // Predicated region
    $region34: #{network_forward.1} parent=1 // pred_check
      _
    $region35: #{network_forward.1} parent=1 // pred_check_branch
      %52 = sbr.rel (0) target = $region37
    $region36: #{network_forward.1} parent=1 // pred_region
      _
    $region37: #{network_forward.1} parent=1 // pred_fallthru
      _
    // Predicated region
    $region38: #{network_forward.1} parent=1 // pred_check
      _
    $region39: #{network_forward.1} parent=1 // pred_check_branch
      %54 = sbr.rel (0) target = $region41
    $region40: #{network_forward.1} parent=1 // pred_region
      %55 = dma.done [#allocation3], 128
    $region41: #{network_forward.1} parent=1 // pred_fallthru
      _
    // Predicated region
    $region42: #{network_forward.1} parent=1 // pred_check
      _
    $region43: #{network_forward.1} parent=1 // pred_check_branch
      %57 = sbr.rel (0) target = $region45
    $region44: #{network_forward.1} parent=1 // pred_region
      %58 = dma.done [#allocation6], 512
    $region45: #{network_forward.1} parent=1 // pred_fallthru
      _
    %v59 = vld [vmem:[#allocation2] sm:$0xff]
    %v60 = vld [vmem:[%s1] sm:$0xff]
    %v61 = vld [vmem:[%s1 + $0x8] sm:$0xff]
    %v62 = vld [vmem:[%s2] sm:$0x1]
    %v64 = vlaneseq
    %v65 = vshrl.u32 %v64, 7
    %v66 = vsub.s32 0, %v65
    %v67 = vrot.slane %v62, %v66
    %vm69 = vcmask 130048
    %v71 = vsel %vm69, %v59, 0
    %73 = vmatprep.subr.mxu0 0.0
    %74 = vmatpush1.msra.mxu0 %v60
    %75 = vmatprep.subr.mxu0 0.0
    %76 = vmatpush1.msra.mxu0 %v61
    %77 = vmatprep.subr.mxu0 0.0
    %78 = vmatpush1.msra.mxu0 0.0
    %79 = vmatprep.subr.mxu0 0.0
    %80 = vmatpush1.msra.mxu0 0.0
    %81 = vmatprep.subr.mxu0 0.0
    %82 = vmatpush1.msra.mxu0 0.0
    %83 = vmatprep.subr.mxu0 0.0
    %84 = vmatpush1.msra.mxu0 0.0
    %85 = vmatprep.subr.mxu0 0.0
    %86 = vmatpush1.msra.mxu0 0.0
    %87 = vmatprep.subr.mxu0 0.0
    %88 = vmatpush1.msra.mxu0 0.0
    %89 = vmatprep.subr.mxu0 0.0
    %90 = vmatpush1.msra.mxu0 0.0
    %91 = vmatprep.subr.mxu0 0.0
    %92 = vmatpush1.msra.mxu0 0.0
    %93 = vmatprep.subr.mxu0 0.0
    %94 = vmatpush1.msra.mxu0 0.0
    %95 = vmatprep.subr.mxu0 0.0
    %96 = vmatpush1.msra.mxu0 0.0
    %97 = vmatprep.subr.mxu0 0.0
    %98 = vmatpush1.msra.mxu0 0.0
    %99 = vmatprep.subr.mxu0 0.0
    %100 = vmatpush1.msra.mxu0 0.0
    %101 = vmatprep.subr.mxu0 0.0
    %102 = vmatpush1.msra.mxu0 0.0
    %103 = vmatprep.subr.mxu0 0.0
    %104 = vmatpush1.msra.mxu0 0.0
    %105 = vmatprep.subr.mxu0 0.0
    %106 = vmatpush1.msra.mxu0 0.0
    %107 = vmatprep.subr.mxu0 0.0
    %108 = vmatpush1.msra.mxu0 0.0
    %109 = vmatprep.subr.mxu0 0.0
    %110 = vmatpush1.msra.mxu0 0.0
    %111 = vmatprep.subr.mxu0 0.0
    %112 = vmatpush1.msra.mxu0 0.0
    %113 = vmatprep.subr.mxu0 0.0
    %114 = vmatpush1.msra.mxu0 0.0
    %115 = vmatprep.subr.mxu0 0.0
    %116 = vmatpush1.msra.mxu0 0.0
    %117 = vmatprep.subr.mxu0 0.0
    %118 = vmatpush1.msra.mxu0 0.0
    %119 = vmatprep.subr.mxu0 0.0
    %120 = vmatpush1.msra.mxu0 0.0
    %121 = vmatprep.subr.mxu0 0.0
    %122 = vmatpush1.msra.mxu0 0.0
    %123 = vmatprep.subr.mxu0 0.0
    %124 = vmatpush1.msra.mxu0 0.0
    %125 = vmatprep.subr.mxu0 0.0
    %126 = vmatpush1.msra.mxu0 0.0
    %127 = vmatprep.subr.mxu0 0.0
    %128 = vmatpush1.msra.mxu0 0.0
    %129 = vmatprep.subr.mxu0 0.0
    %130 = vmatpush1.msra.mxu0 0.0
    %131 = vmatprep.subr.mxu0 0.0
    %132 = vmatpush1.msra.mxu0 0.0
    %133 = vmatprep.subr.mxu0 0.0
    %134 = vmatpush1.msra.mxu0 0.0
    %135 = vmatprep.subr.mxu0 0.0
    %136 = vmatpush1.msra.mxu0 0.0
    %137 = vmatprep.mubr.f32.mxu0 0.0
    %138 = vmatmul.mubr.f32.gmra.mrb[0].mxu0 %v71
    %v139 = vpop.f32.mrb[0].mxu0
    %v140 = vadd.f32 %v67, %v139
    %v141 = vpop.f32.mrb[0].mxu0
    %142 = vdwg.mxu0
    %v143 = vmax.f32 %v140, 0.0
    %v144 = vld [vmem:[%s3] sm:$0xff]
    %v145 = vld [vmem:[%s3 + $0x8] sm:$0xff]
    %v146 = vld [vmem:[%s3 + $0x10] sm:$0xff]
    %v147 = vld [vmem:[%s3 + $0x18] sm:$0xff]
    %v148 = vld [vmem:[%s4] sm:$0x1]
    %v150 = vlaneseq
    %v151 = vshrl.u32 %v150, 7
    %v152 = vsub.s32 0, %v151
    %v153 = vrot.slane %v148, %v152
    %vm155 = vcmask 261120
    %v157 = vsel %vm155, %v143, 0
    %159 = vmatprep.subr.mxu0 0.0
    %160 = vmatpush1.msra.mxu0 %v144
    %161 = vmatprep.subr.mxu0 0.0
    %162 = vmatpush1.msra.mxu0 %v145
    %163 = vmatprep.subr.mxu0 0.0
    %164 = vmatpush1.msra.mxu0 %v146
    %165 = vmatprep.subr.mxu0 0.0
    %166 = vmatpush1.msra.mxu0 %v147
    %167 = vmatprep.subr.mxu0 0.0
    %168 = vmatpush1.msra.mxu0 0.0
    %169 = vmatprep.subr.mxu0 0.0
    %170 = vmatpush1.msra.mxu0 0.0
    %171 = vmatprep.subr.mxu0 0.0
    %172 = vmatpush1.msra.mxu0 0.0
    %173 = vmatprep.subr.mxu0 0.0
    %174 = vmatpush1.msra.mxu0 0.0
    %175 = vmatprep.subr.mxu0 0.0
    %176 = vmatpush1.msra.mxu0 0.0
    %177 = vmatprep.subr.mxu0 0.0
    %178 = vmatpush1.msra.mxu0 0.0
    %179 = vmatprep.subr.mxu0 0.0
    %180 = vmatpush1.msra.mxu0 0.0
    %181 = vmatprep.subr.mxu0 0.0
    %182 = vmatpush1.msra.mxu0 0.0
    %183 = vmatprep.subr.mxu0 0.0
    %184 = vmatpush1.msra.mxu0 0.0
    %185 = vmatprep.subr.mxu0 0.0
    %186 = vmatpush1.msra.mxu0 0.0
    %187 = vmatprep.subr.mxu0 0.0
    %188 = vmatpush1.msra.mxu0 0.0
    %189 = vmatprep.subr.mxu0 0.0
    %190 = vmatpush1.msra.mxu0 0.0
    %191 = vmatprep.subr.mxu0 0.0
    %192 = vmatpush1.msra.mxu0 0.0
    %193 = vmatprep.subr.mxu0 0.0
    %194 = vmatpush1.msra.mxu0 0.0
    %195 = vmatprep.subr.mxu0 0.0
    %196 = vmatpush1.msra.mxu0 0.0
    %197 = vmatprep.subr.mxu0 0.0
    %198 = vmatpush1.msra.mxu0 0.0
    %199 = vmatprep.subr.mxu0 0.0
    %200 = vmatpush1.msra.mxu0 0.0
    %201 = vmatprep.subr.mxu0 0.0
    %202 = vmatpush1.msra.mxu0 0.0
    %203 = vmatprep.subr.mxu0 0.0
    %204 = vmatpush1.msra.mxu0 0.0
    %205 = vmatprep.subr.mxu0 0.0
    %206 = vmatpush1.msra.mxu0 0.0
    %207 = vmatprep.subr.mxu0 0.0
    %208 = vmatpush1.msra.mxu0 0.0
    %209 = vmatprep.subr.mxu0 0.0
    %210 = vmatpush1.msra.mxu0 0.0
    %211 = vmatprep.subr.mxu0 0.0
    %212 = vmatpush1.msra.mxu0 0.0
    %213 = vmatprep.subr.mxu0 0.0
    %214 = vmatpush1.msra.mxu0 0.0
    %215 = vmatprep.subr.mxu0 0.0
    %216 = vmatpush1.msra.mxu0 0.0
    %217 = vmatprep.subr.mxu0 0.0
    %218 = vmatpush1.msra.mxu0 0.0
    %219 = vmatprep.subr.mxu0 0.0
    %220 = vmatpush1.msra.mxu0 0.0
    %221 = vmatprep.subr.mxu0 0.0
    %222 = vmatpush1.msra.mxu0 0.0
    %223 = vmatprep.mubr.f32.mxu0 0.0
    %224 = vmatmul.mubr.f32.gmra.mrb[0].mxu0 %v157
    %v225 = vpop.f32.mrb[0].mxu0
    %v226 = vadd.f32 %v153, %v225
    %v227 = vpop.f32.mrb[0].mxu0
    %228 = vdwg.mxu0
    %v229 = vmax.f32 %v226, 0.0
    %v230 = vld [vmem:[#allocation5] sm:$0xff]
    %v231 = vld [vmem:[#allocation5 + $0x8] sm:$0xff]
    %v232 = vld [vmem:[#allocation5 + $0x10] sm:$0xff]
    %v233 = vld [vmem:[#allocation5 + $0x18] sm:$0xff]
    %v234 = vld [vmem:[%s6] sm:$0x1]
    %v236 = vlaneseq
    %v237 = vshrl.u32 %v236, 7
    %v238 = vsub.s32 0, %v237
    %v239 = vrot.slane %v234, %v238
    %v242 = vsel %vm155, %v229, 0
    %244 = vmatprep.subr.mxu0 0.0
    %245 = vmatpush1.msra.mxu0 %v230
    %246 = vmatprep.subr.mxu0 0.0
    %247 = vmatpush1.msra.mxu0 %v231
    %248 = vmatprep.subr.mxu0 0.0
    %249 = vmatpush1.msra.mxu0 %v232
    %250 = vmatprep.subr.mxu0 0.0
    %251 = vmatpush1.msra.mxu0 %v233
    %252 = vmatprep.subr.mxu0 0.0
    %253 = vmatpush1.msra.mxu0 0.0
    %254 = vmatprep.subr.mxu0 0.0
    %255 = vmatpush1.msra.mxu0 0.0
    %256 = vmatprep.subr.mxu0 0.0
    %257 = vmatpush1.msra.mxu0 0.0
    %258 = vmatprep.subr.mxu0 0.0
    %259 = vmatpush1.msra.mxu0 0.0
    %260 = vmatprep.subr.mxu0 0.0
    %261 = vmatpush1.msra.mxu0 0.0
    %262 = vmatprep.subr.mxu0 0.0
    %263 = vmatpush1.msra.mxu0 0.0
    %264 = vmatprep.subr.mxu0 0.0
    %265 = vmatpush1.msra.mxu0 0.0
    %266 = vmatprep.subr.mxu0 0.0
    %267 = vmatpush1.msra.mxu0 0.0
    %268 = vmatprep.subr.mxu0 0.0
    %269 = vmatpush1.msra.mxu0 0.0
    %270 = vmatprep.subr.mxu0 0.0
    %271 = vmatpush1.msra.mxu0 0.0
    %272 = vmatprep.subr.mxu0 0.0
    %273 = vmatpush1.msra.mxu0 0.0
    %274 = vmatprep.subr.mxu0 0.0
    %275 = vmatpush1.msra.mxu0 0.0
    %276 = vmatprep.subr.mxu0 0.0
    %277 = vmatpush1.msra.mxu0 0.0
    %278 = vmatprep.subr.mxu0 0.0
    %279 = vmatpush1.msra.mxu0 0.0
    %280 = vmatprep.subr.mxu0 0.0
    %281 = vmatpush1.msra.mxu0 0.0
    %282 = vmatprep.subr.mxu0 0.0
    %283 = vmatpush1.msra.mxu0 0.0
    %284 = vmatprep.subr.mxu0 0.0
    %285 = vmatpush1.msra.mxu0 0.0
    %286 = vmatprep.subr.mxu0 0.0
    %287 = vmatpush1.msra.mxu0 0.0
    %288 = vmatprep.subr.mxu0 0.0
    %289 = vmatpush1.msra.mxu0 0.0
    %290 = vmatprep.subr.mxu0 0.0
    %291 = vmatpush1.msra.mxu0 0.0
    %292 = vmatprep.subr.mxu0 0.0
    %293 = vmatpush1.msra.mxu0 0.0
    %294 = vmatprep.subr.mxu0 0.0
    %295 = vmatpush1.msra.mxu0 0.0
    %296 = vmatprep.subr.mxu0 0.0
    %297 = vmatpush1.msra.mxu0 0.0
    %298 = vmatprep.subr.mxu0 0.0
    %299 = vmatpush1.msra.mxu0 0.0
    %300 = vmatprep.subr.mxu0 0.0
    %301 = vmatpush1.msra.mxu0 0.0
    %302 = vmatprep.subr.mxu0 0.0
    %303 = vmatpush1.msra.mxu0 0.0
    %304 = vmatprep.subr.mxu0 0.0
    %305 = vmatpush1.msra.mxu0 0.0
    %306 = vmatprep.subr.mxu0 0.0
    %307 = vmatpush1.msra.mxu0 0.0
    %308 = vmatprep.mubr.f32.mxu0 0.0
    %309 = vmatmul.mubr.f32.gmra.mrb[0].mxu0 %v242
    %v310 = vpop.f32.mrb[0].mxu0
    %v311 = vadd.f32 %v239, %v310
    %v312 = vpop.f32.mrb[0].mxu0
    %313 = vdwg.mxu0
    %v314 = vtanh.pop %v311
    %v315 = vld [vmem:[%s7] sm:$0xff]
    %v316 = vld [vmem:[%s7 + $0x8] sm:$0xff]
    %v317 = vld [vmem:[%s7 + $0x10] sm:$0xff]
    %v318 = vld [vmem:[%s7 + $0x18] sm:$0xff]
    %v319 = vld [vmem:[%s8] sm:$0x1]
    %v321 = vlaneseq
    %v322 = vshrl.u32 %v321, 7
    %v323 = vsub.s32 0, %v322
    %v324 = vrot.slane %v319, %v323
    %v327 = vsel %vm155, %v314, 0
    %329 = vmatprep.subr.mxu0 0.0
    %330 = vmatpush1.msra.mxu0 %v315
    %331 = vmatprep.subr.mxu0 0.0
    %332 = vmatpush1.msra.mxu0 %v316
    %333 = vmatprep.subr.mxu0 0.0
    %334 = vmatpush1.msra.mxu0 %v317
    %335 = vmatprep.subr.mxu0 0.0
    %336 = vmatpush1.msra.mxu0 %v318
    %337 = vmatprep.subr.mxu0 0.0
    %338 = vmatpush1.msra.mxu0 0.0
    %339 = vmatprep.subr.mxu0 0.0
    %340 = vmatpush1.msra.mxu0 0.0
    %341 = vmatprep.subr.mxu0 0.0
    %342 = vmatpush1.msra.mxu0 0.0
    %343 = vmatprep.subr.mxu0 0.0
    %344 = vmatpush1.msra.mxu0 0.0
    %345 = vmatprep.subr.mxu0 0.0
    %346 = vmatpush1.msra.mxu0 0.0
    %347 = vmatprep.subr.mxu0 0.0
    %348 = vmatpush1.msra.mxu0 0.0
    %349 = vmatprep.subr.mxu0 0.0
    %350 = vmatpush1.msra.mxu0 0.0
    %351 = vmatprep.subr.mxu0 0.0
    %352 = vmatpush1.msra.mxu0 0.0
    %353 = vmatprep.subr.mxu0 0.0
    %354 = vmatpush1.msra.mxu0 0.0
    %355 = vmatprep.subr.mxu0 0.0
    %356 = vmatpush1.msra.mxu0 0.0
    %357 = vmatprep.subr.mxu0 0.0
    %358 = vmatpush1.msra.mxu0 0.0
    %359 = vmatprep.subr.mxu0 0.0
    %360 = vmatpush1.msra.mxu0 0.0
    %361 = vmatprep.subr.mxu0 0.0
    %362 = vmatpush1.msra.mxu0 0.0
    %363 = vmatprep.subr.mxu0 0.0
    %364 = vmatpush1.msra.mxu0 0.0
    %365 = vmatprep.subr.mxu0 0.0
    %366 = vmatpush1.msra.mxu0 0.0
    %367 = vmatprep.subr.mxu0 0.0
    %368 = vmatpush1.msra.mxu0 0.0
    %369 = vmatprep.subr.mxu0 0.0
    %370 = vmatpush1.msra.mxu0 0.0
    %371 = vmatprep.subr.mxu0 0.0
    %372 = vmatpush1.msra.mxu0 0.0
    %373 = vmatprep.subr.mxu0 0.0
    %374 = vmatpush1.msra.mxu0 0.0
    %375 = vmatprep.subr.mxu0 0.0
    %376 = vmatpush1.msra.mxu0 0.0
    %377 = vmatprep.subr.mxu0 0.0
    %378 = vmatpush1.msra.mxu0 0.0
    %379 = vmatprep.subr.mxu0 0.0
    %380 = vmatpush1.msra.mxu0 0.0
    %381 = vmatprep.subr.mxu0 0.0
    %382 = vmatpush1.msra.mxu0 0.0
    %383 = vmatprep.subr.mxu0 0.0
    %384 = vmatpush1.msra.mxu0 0.0
    %385 = vmatprep.subr.mxu0 0.0
    %386 = vmatpush1.msra.mxu0 0.0
    %387 = vmatprep.subr.mxu0 0.0
    %388 = vmatpush1.msra.mxu0 0.0
    %389 = vmatprep.subr.mxu0 0.0
    %390 = vmatpush1.msra.mxu0 0.0
    %391 = vmatprep.subr.mxu0 0.0
    %392 = vmatpush1.msra.mxu0 0.0
    %393 = vmatprep.mubr.f32.mxu0 0.0
    %394 = vmatmul.mubr.f32.gmra.mrb[0].mxu0 %v327
    %v395 = vpop.f32.mrb[0].mxu0
    %v396 = vadd.f32 %v324, %v395
    %v397 = vpop.f32.mrb[0].mxu0
    %398 = vdwg.mxu0
    %vm399 = vcmask 64512
    %400 = vst.msk [vmem:[#allocation7] sm:$0xff] %vm399, %v396
    // Predicated region
    $region46: #{network_forward.1} parent=1 // pred_check
      _
    $region47: #{network_forward.1} parent=1 // pred_check_branch
      %402 = sbr.rel (0) target = $region49
    $region48: #{network_forward.1} parent=1 // pred_region
      %s404 = ssub.s32 128, 128
      %405 = vsyncadd [#allocation4], %s404
      %s407 = sshll.u32 [#allocation7], 4
      %s408 = int_to_ptr.vmem [resolvable:$true] %s407
      %410 = dma.vmem_to_hbm [thread:$0]  %s408, 128, %s9, [#allocation4]
    $region49: #{network_forward.1} parent=1 // pred_fallthru
      _
    // Predicated region
    $region50: #{network_forward.1} parent=1 // pred_check
      _
    $region51: #{network_forward.1} parent=1 // pred_check_branch
      %412 = sbr.rel (0) target = $region53
    $region52: #{network_forward.1} parent=1 // pred_region
      %413 = dma.done [#allocation4], 128
    $region53: #{network_forward.1} parent=1 // pred_fallthru
      _
    %414 = vsyncpa [#allocation3], 1
    %415 = vsyncpa [#allocation6], 1
    %416 = vsyncpa [#allocation4], 1

</llo_original>
